<compile_context>
chip_gen: v6e
topology: v6e:2x2x1
jax: 0.10.0
libtpu: 0.0.40
codegen_flags: <defaults>
</compile_context>

<pallas_src>
import functools

import jax
import jax.numpy as jnp
from jax import lax
from jax.experimental import pallas as pl
from jax.experimental.pallas import tpu as pltpu


def _round_up(x, m):
    return ((x + m - 1) // m) * m


def _actor_critic_kernel(
    x_ref,
    w1_ref, b1_ref,
    w2_ref, b2_ref,
    wh1_ref, bh1_ref,      # fused [policy_layer1 | value_layer1]
    wh2_ref, bh2_ref,      # fused block-diag [policy_layer2 ; value_layer2], lane-padded
    out_ref,               # packed lane-dense output (TB, PAD)
    *,
    no_actions,
):
    x = x_ref[...]

    # shared trunk: Linear -> ReLU -> Linear -> ReLU
    h = jnp.dot(x, w1_ref[...], preferred_element_type=jnp.float32) + b1_ref[...]
    h = jnp.maximum(h, 0.0)
    h2 = jnp.dot(h, w2_ref[...], preferred_element_type=jnp.float32) + b2_ref[...]
    h2 = jnp.maximum(h2, 0.0)

    # fused head first layers: one wide matmul, ReLU applies to both branches
    u = jnp.dot(h2, wh1_ref[...], preferred_element_type=jnp.float32) + bh1_ref[...]
    u = jnp.maximum(u, 0.0)

    # fused head second layers: logits land in lanes [0, A), value in lane A
    z = jnp.dot(u, wh2_ref[...], preferred_element_type=jnp.float32) + bh2_ref[...]

    lane = lax.broadcasted_iota(jnp.int32, z.shape, dimension=1)
    is_logit = lane < no_actions

    # masked softmax over the real action lanes only
    logits = jnp.where(is_logit, z, -jnp.inf)
    m = jnp.max(logits, axis=-1, keepdims=True)
    e = jnp.exp(logits - m)                       # padding lanes -> exp(-inf) = 0
    denom = jnp.sum(e, axis=-1, keepdims=True)
    probs = e * pl.reciprocal(denom, approx=True)  # EUP slot, effectively free

    # packed, lane-dense writeback: policy probs | value | zeros
    out_ref[...] = jnp.where(is_logit, probs,
                             jnp.where(lane == no_actions, z, 0.0))


def pack_params(params, no_actions):
    """Fuse the two head branches into wide, lane-friendly weight buffers."""
    H2 = params["wp1"].shape[0]
    A = no_actions
    pad_w = _round_up(max(A + 1, 128), 128)   # lane-dense packed output width

    wh1 = jnp.concatenate([params["wp1"], params["wv1"]], axis=1)   # (H2, 2*H2)
    bh1 = jnp.concatenate([params["bp1"], params["bv1"]], axis=1)   # (1, 2*H2)

    wh2 = jnp.zeros((2 * H2, pad_w), jnp.float32)
    wh2 = wh2.at[:H2, :A].set(params["wp2"])          # policy branch -> lanes [0, A)
    wh2 = wh2.at[H2:, A].set(params["wv2"][:, 0])     # value branch  -> lane A
    bh2 = jnp.zeros((1, pad_w), jnp.float32)
    bh2 = bh2.at[0, :A].set(params["bp2"][0])
    bh2 = bh2.at[0, A].set(params["bv2"][0, 0])

    return dict(w1=params["w1"], b1=params["b1"],
                w2=params["w2"], b2=params["b2"],
                wh1=wh1, bh1=bh1, wh2=wh2, bh2=bh2)


def actor_critic_forward(state, packed, no_actions):
    """state: (B, input_features) f32. packed: output of pack_params."""
    w1, b1 = packed["w1"], packed["b1"]
    w2, b2 = packed["w2"], packed["b2"]
    wh1, bh1 = packed["wh1"], packed["bh1"]
    wh2, bh2 = packed["wh2"], packed["bh2"]

    B, IN = state.shape
    H1 = w1.shape[1]
    H2 = w2.shape[1]
    WH1 = wh1.shape[1]     # 2*H2
    PAD = wh2.shape[1]     # lane-dense packed output width (multiple of 128)

    # batch tile: multiple of 8 sublanes; pad batch so every block is full
    TB = min(128, _round_up(B, 8))
    Bp = _round_up(B, TB)
    x = state if Bp == B else jnp.pad(state, ((0, Bp - B), (0, 0)))

    full = lambda i: (0, 0)   # resident weights: same block for every grid step

    out = pl.pallas_call(
        functools.partial(_actor_critic_kernel, no_actions=no_actions),
        out_shape=jax.ShapeDtypeStruct((Bp, PAD), jnp.float32),
        grid_spec=pltpu.PrefetchScalarGridSpec(
            num_scalar_prefetch=0,
            grid=(Bp // TB,),
            in_specs=[
                pl.BlockSpec((TB, IN), lambda i: (i, 0)),   # x
                pl.BlockSpec((IN, H1), full),               # w1
                pl.BlockSpec((1, H1), full),                # b1
                pl.BlockSpec((H1, H2), full),               # w2
                pl.BlockSpec((1, H2), full),                # b2
                pl.BlockSpec((H2, WH1), full),              # fused head-1 weights
                pl.BlockSpec((1, WH1), full),               # fused head-1 biases
                pl.BlockSpec((WH1, PAD), full),             # fused head-2 weights
                pl.BlockSpec((1, PAD), full),               # fused head-2 biases
            ],
            out_specs=pl.BlockSpec((TB, PAD), lambda i: (i, 0)),
        ),
        compiler_params=pltpu.CompilerParams(
            dimension_semantics=("parallel",)),             # megacore on v7x
    )(x, w1, b1, w2, b2, wh1, bh1, wh2, bh2)

    policy = out[:B, :no_actions]
    value = out[:B, no_actions:no_actions + 1]
    return policy, value


def init_params(key, input_features, hidden_features, hidden2_features, no_actions):
    """Deterministic synthetic init. Weights stored as (in, out) so the kernel does x @ W + b."""
    ks = jax.random.split(key, 12)

    def lin(kw, kb, fan_in, fan_out):
        # mimic torch.nn.Linear's U(-1/sqrt(fan_in), 1/sqrt(fan_in)) init
        bound = 1.0 / jnp.sqrt(jnp.float32(fan_in))
        w = jax.random.uniform(kw, (fan_in, fan_out), jnp.float32, -bound, bound)
        b = jax.random.uniform(kb, (1, fan_out), jnp.float32, -bound, bound)
        return w, b

    w1, b1 = lin(ks[0], ks[1], input_features, hidden_features)
    w2, b2 = lin(ks[2], ks[3], hidden_features, hidden2_features)
    wp1, bp1 = lin(ks[4], ks[5], hidden2_features, hidden2_features)
    wp2, bp2 = lin(ks[6], ks[7], hidden2_features, no_actions)
    wv1, bv1 = lin(ks[8], ks[9], hidden2_features, hidden2_features)
    wv2, bv2 = lin(ks[10], ks[11], hidden2_features, 1)
    return dict(w1=w1, b1=b1, w2=w2, b2=b2,
                wp1=wp1, bp1=bp1, wp2=wp2, bp2=bp2,
                wv1=wv1, bv1=bv1, wv2=wv2, bv2=bv2)


def _reference_forward(state, p):
    # pure-JAX reference for correctness check
    h = jnp.maximum(state @ p["w1"] + p["b1"], 0.0)
    h2 = jnp.maximum(h @ p["w2"] + p["b2"], 0.0)
    pol = jnp.maximum(h2 @ p["wp1"] + p["bp1"], 0.0)
    logits = pol @ p["wp2"] + p["bp2"]
    policy = jax.nn.softmax(logits, axis=-1)
    v = jnp.maximum(h2 @ p["wv1"] + p["bv1"], 0.0)
    value = v @ p["wv2"] + p["bv2"]
    return policy, value


if __name__ == "__main__":
    key = jax.random.PRNGKey(0)
    k_state, k_params = jax.random.split(key)

    # small shapes consistent with the module's forward
    batch = 8
    input_features = 32
    hidden_features = 64
    hidden2_features = 64
    no_actions = 8

    state = jax.random.normal(k_state, (batch, input_features), jnp.float32)
    params = init_params(k_params, input_features, hidden_features,
                         hidden2_features, no_actions)
    packed = pack_params(params, no_actions)

    policy, value = actor_critic_forward(state, packed, no_actions)
    policy, value = jax.block_until_ready((policy, value))

    # sanity check against pure-JAX reference
    ref_policy, ref_value = _reference_forward(state, params)
    assert policy.shape == (batch, no_actions) and value.shape == (batch, 1)
    assert jnp.allclose(value, ref_value, atol=1e-5, rtol=1e-5)
    # policy softmax uses the EUP approximate reciprocal -> slightly looser tolerance
    assert jnp.allclose(policy, ref_policy, atol=5e-3, rtol=5e-3)
    assert jnp.allclose(jnp.sum(policy, axis=-1), 1.0, atol=5e-3)

    print("KERNEL_OK")
</pallas_src>

<mosaic_0001>
module attributes {stable_mosaic.version = 11 : i64} {
  func.func @_actor_critic_kernel(%arg0: i32, %arg1: memref<8x32xf32, #tpu.memory_space<vmem>>, %arg2: memref<32x64xf32, #tpu.memory_space<vmem>>, %arg3: memref<1x64xf32, #tpu.memory_space<vmem>>, %arg4: memref<64x64xf32, #tpu.memory_space<vmem>>, %arg5: memref<1x64xf32, #tpu.memory_space<vmem>>, %arg6: memref<64x128xf32, #tpu.memory_space<vmem>>, %arg7: memref<1x128xf32, #tpu.memory_space<vmem>>, %arg8: memref<128x128xf32, #tpu.memory_space<vmem>>, %arg9: memref<1x128xf32, #tpu.memory_space<vmem>>, %arg10: memref<8x128xf32, #tpu.memory_space<vmem>>) attributes {dimension_semantics = [#tpu.dimension_semantics<parallel>], iteration_bounds = array<i64: 1>, scalar_prefetch = 0 : i64, scratch_operands = 0 : i64, tpu.core_type = #tpu.core_type<tc>, window_params = [{transform_indices = @transform_0, window_bounds = array<i64: 8, 32>}, {pipeline_mode = #tpu.pipeline_mode<synchronous>, transform_indices = @transform_1, window_bounds = array<i64: 32, 64>}, {pipeline_mode = #tpu.pipeline_mode<synchronous>, transform_indices = @transform_2, window_bounds = array<i64: 1, 64>}, {pipeline_mode = #tpu.pipeline_mode<synchronous>, transform_indices = @transform_3, window_bounds = array<i64: 64, 64>}, {pipeline_mode = #tpu.pipeline_mode<synchronous>, transform_indices = @transform_4, window_bounds = array<i64: 1, 64>}, {pipeline_mode = #tpu.pipeline_mode<synchronous>, transform_indices = @transform_5, window_bounds = array<i64: 64, 128>}, {pipeline_mode = #tpu.pipeline_mode<synchronous>, transform_indices = @transform_6, window_bounds = array<i64: 1, 128>}, {pipeline_mode = #tpu.pipeline_mode<synchronous>, transform_indices = @transform_7, window_bounds = array<i64: 128, 128>}, {pipeline_mode = #tpu.pipeline_mode<synchronous>, transform_indices = @transform_8, window_bounds = array<i64: 1, 128>}, {transform_indices = @transform_9, window_bounds = array<i64: 8, 128>}]} {
    %c0 = arith.constant 0 : index
    %c0_0 = arith.constant 0 : index
    %0 = vector.load %arg1[%c0, %c0_0] : memref<8x32xf32, #tpu.memory_space<vmem>>, vector<8x32xf32>
    %c0_1 = arith.constant 0 : index
    %c0_2 = arith.constant 0 : index
    %1 = vector.load %arg2[%c0_1, %c0_2] : memref<32x64xf32, #tpu.memory_space<vmem>>, vector<32x64xf32>
    %cst = arith.constant dense<0.000000e+00> : vector<8x64xf32>
    %2 = tpu.matmul %0, %1, %cst {dimension_numbers = #tpu.dot_dimension_numbers<[1], [0], [0], [1], [0, 0, 1, 1], [], []>} : vector<8x32xf32>, vector<32x64xf32>, vector<8x64xf32> -> vector<8x64xf32>
    %c0_3 = arith.constant 0 : index
    %c0_4 = arith.constant 0 : index
    %3 = vector.load %arg3[%c0_3, %c0_4] : memref<1x64xf32, #tpu.memory_space<vmem>>, vector<1x64xf32>
    %4 = vector.broadcast %3 : vector<1x64xf32> to vector<8x64xf32>
    %5 = arith.addf %2, %4 : vector<8x64xf32>
    %cst_5 = arith.constant 0.000000e+00 : f32
    %6 = vector.broadcast %cst_5 : f32 to vector<8x64xf32>
    %7 = arith.maximumf %5, %6 : vector<8x64xf32>
    %c0_6 = arith.constant 0 : index
    %c0_7 = arith.constant 0 : index
    %8 = vector.load %arg4[%c0_6, %c0_7] : memref<64x64xf32, #tpu.memory_space<vmem>>, vector<64x64xf32>
    %cst_8 = arith.constant dense<0.000000e+00> : vector<8x64xf32>
    %9 = tpu.matmul %7, %8, %cst_8 {dimension_numbers = #tpu.dot_dimension_numbers<[1], [0], [0], [1], [0, 0, 1, 1], [], []>} : vector<8x64xf32>, vector<64x64xf32>, vector<8x64xf32> -> vector<8x64xf32>
    %c0_9 = arith.constant 0 : index
    %c0_10 = arith.constant 0 : index
    %10 = vector.load %arg5[%c0_9, %c0_10] : memref<1x64xf32, #tpu.memory_space<vmem>>, vector<1x64xf32>
    %11 = vector.broadcast %10 : vector<1x64xf32> to vector<8x64xf32>
    %12 = arith.addf %9, %11 : vector<8x64xf32>
    %cst_11 = arith.constant 0.000000e+00 : f32
    %13 = vector.broadcast %cst_11 : f32 to vector<8x64xf32>
    %14 = arith.maximumf %12, %13 : vector<8x64xf32>
    %c0_12 = arith.constant 0 : index
    %c0_13 = arith.constant 0 : index
    %15 = vector.load %arg6[%c0_12, %c0_13] : memref<64x128xf32, #tpu.memory_space<vmem>>, vector<64x128xf32>
    %cst_14 = arith.constant dense<0.000000e+00> : vector<8x128xf32>
    %16 = tpu.matmul %14, %15, %cst_14 {dimension_numbers = #tpu.dot_dimension_numbers<[1], [0], [0], [1], [0, 0, 1, 1], [], []>} : vector<8x64xf32>, vector<64x128xf32>, vector<8x128xf32> -> vector<8x128xf32>
    %c0_15 = arith.constant 0 : index
    %c0_16 = arith.constant 0 : index
    %17 = vector.load %arg7[%c0_15, %c0_16] : memref<1x128xf32, #tpu.memory_space<vmem>>, vector<1x128xf32>
    %18 = vector.broadcast %17 : vector<1x128xf32> to vector<8x128xf32>
    %19 = arith.addf %16, %18 : vector<8x128xf32>
    %cst_17 = arith.constant 0.000000e+00 : f32
    %20 = vector.broadcast %cst_17 : f32 to vector<8x128xf32>
    %21 = arith.maximumf %19, %20 : vector<8x128xf32>
    %c0_18 = arith.constant 0 : index
    %c0_19 = arith.constant 0 : index
    %22 = vector.load %arg8[%c0_18, %c0_19] : memref<128x128xf32, #tpu.memory_space<vmem>>, vector<128x128xf32>
    %cst_20 = arith.constant dense<0.000000e+00> : vector<8x128xf32>
    %23 = tpu.matmul %21, %22, %cst_20 {dimension_numbers = #tpu.dot_dimension_numbers<[1], [0], [0], [1], [0, 0, 1, 1], [], []>} : vector<8x128xf32>, vector<128x128xf32>, vector<8x128xf32> -> vector<8x128xf32>
    %c0_21 = arith.constant 0 : index
    %c0_22 = arith.constant 0 : index
    %24 = vector.load %arg9[%c0_21, %c0_22] : memref<1x128xf32, #tpu.memory_space<vmem>>, vector<1x128xf32>
    %25 = vector.broadcast %24 : vector<1x128xf32> to vector<8x128xf32>
    %26 = arith.addf %23, %25 : vector<8x128xf32>
    %27 = tpu.iota {dimensions = array<i32: 1>} : vector<8x128xi32>
    %c8_i32 = arith.constant 8 : i32
    %28 = vector.broadcast %c8_i32 : i32 to vector<8x128xi32>
    %29 = arith.cmpi slt, %27, %28 : vector<8x128xi32>
    %cst_23 = arith.constant 0xFF800000 : f32
    %30 = vector.broadcast %cst_23 : f32 to vector<8x128xf32>
    %31 = arith.select %29, %26, %30 : vector<8x128xi1>, vector<8x128xf32>
    %cst_24 = arith.constant dense<0xFF800000> : vector<8xf32>
    %32 = vector.multi_reduction <maximumf>, %31, %cst_24 [1] : vector<8x128xf32> to vector<8xf32>
    %33 = vector.shape_cast %32 : vector<8xf32> to vector<8x1xf32>
    %34 = vector.broadcast %33 : vector<8x1xf32> to vector<8x128xf32>
    %35 = arith.subf %31, %34 : vector<8x128xf32>
    %36 = math.exp %35 : vector<8x128xf32>
    %cst_25 = arith.constant dense<0.000000e+00> : vector<8xf32>
    %37 = vector.multi_reduction <add>, %36, %cst_25 [1] : vector<8x128xf32> to vector<8xf32>
    %38 = vector.shape_cast %37 : vector<8xf32> to vector<8x1xf32>
    %39 = tpu.reciprocal %38 {approx = true} : vector<8x1xf32> -> vector<8x1xf32>
    %40 = vector.broadcast %39 : vector<8x1xf32> to vector<8x128xf32>
    %41 = arith.mulf %36, %40 : vector<8x128xf32>
    %c8_i32_26 = arith.constant 8 : i32
    %42 = vector.broadcast %c8_i32_26 : i32 to vector<8x128xi32>
    %43 = arith.cmpi eq, %27, %42 : vector<8x128xi32>
    %cst_27 = arith.constant 0.000000e+00 : f32
    %44 = vector.broadcast %cst_27 : f32 to vector<8x128xf32>
    %45 = arith.select %43, %26, %44 : vector<8x128xi1>, vector<8x128xf32>
    %46 = arith.select %29, %41, %45 : vector<8x128xi1>, vector<8x128xf32>
    %c0_28 = arith.constant 0 : index
    %c0_29 = arith.constant 0 : index
    %47 = vector.load %arg10[%c0_28, %c0_29] : memref<8x128xf32, #tpu.memory_space<vmem>>, vector<8x128xf32>
    tpu.vector_store %arg10[%c0_28, %c0_29], %46 {strides = array<i32>} : memref<8x128xf32, #tpu.memory_space<vmem>>, vector<8x128xf32>,
    return
  }
  func.func @transform_0(%arg0: i32) -> (i32, i32) {
    %c0_i32 = arith.constant 0 : i32
    %c0_i32_0 = arith.constant 0 : i32
    return %arg0, %c0_i32 : i32, i32
  }
  func.func @transform_1(%arg0: i32) -> (i32, i32) {
    %c0_i32 = arith.constant 0 : i32
    %c0_i32_0 = arith.constant 0 : i32
    %c0_i32_1 = arith.constant 0 : i32
    return %c0_i32, %c0_i32_0 : i32, i32
  }
  func.func @transform_2(%arg0: i32) -> (i32, i32) {
    %c0_i32 = arith.constant 0 : i32
    %c0_i32_0 = arith.constant 0 : i32
    %c0_i32_1 = arith.constant 0 : i32
    return %c0_i32, %c0_i32_0 : i32, i32
  }
  func.func @transform_3(%arg0: i32) -> (i32, i32) {
    %c0_i32 = arith.constant 0 : i32
    %c0_i32_0 = arith.constant 0 : i32
    %c0_i32_1 = arith.constant 0 : i32
    return %c0_i32, %c0_i32_0 : i32, i32
  }
  func.func @transform_4(%arg0: i32) -> (i32, i32) {
    %c0_i32 = arith.constant 0 : i32
    %c0_i32_0 = arith.constant 0 : i32
    %c0_i32_1 = arith.constant 0 : i32
    return %c0_i32, %c0_i32_0 : i32, i32
  }
  func.func @transform_5(%arg0: i32) -> (i32, i32) {
    %c0_i32 = arith.constant 0 : i32
    %c0_i32_0 = arith.constant 0 : i32
    %c0_i32_1 = arith.constant 0 : i32
    return %c0_i32, %c0_i32_0 : i32, i32
  }
  func.func @transform_6(%arg0: i32) -> (i32, i32) {
    %c0_i32 = arith.constant 0 : i32
    %c0_i32_0 = arith.constant 0 : i32
    %c0_i32_1 = arith.constant 0 : i32
    return %c0_i32, %c0_i32_0 : i32, i32
  }
  func.func @transform_7(%arg0: i32) -> (i32, i32) {
    %c0_i32 = arith.constant 0 : i32
    %c0_i32_0 = arith.constant 0 : i32
    %c0_i32_1 = arith.constant 0 : i32
    return %c0_i32, %c0_i32_0 : i32, i32
  }
  func.func @transform_8(%arg0: i32) -> (i32, i32) {
    %c0_i32 = arith.constant 0 : i32
    %c0_i32_0 = arith.constant 0 : i32
    %c0_i32_1 = arith.constant 0 : i32
    return %c0_i32, %c0_i32_0 : i32, i32
  }
  func.func @transform_9(%arg0: i32) -> (i32, i32) {
    %c0_i32 = arith.constant 0 : i32
    %c0_i32_0 = arith.constant 0 : i32
    return %arg0, %c0_i32 : i32, i32
  }
}

</mosaic_0001>

<llo_original>
// kernel: tpu_custom_call.1
$region0: #{tpu_custom_call.1}
  #allocation0 [shape = 'u32[]', space=smem, size = 0x4, offset = 0x4, fixed_abs, tag = 'smem constant byte address 0x4 - core index']
  #allocation1 [shape = 'u32[144,128]{1,0:T(1,128)}', space=vmem, size = 0x12000, scoped, tag = 'internal scratch']
  %s0 = inlined_call_operand.hbm [shape: f32[8,32], index: 0, kind: input, shape index: {}]
  %s1 = inlined_call_operand.hbm [shape: f32[32,64], index: 1, kind: input, shape index: {}]
  %s2 = inlined_call_operand.vmem [shape: f32[1,64], index: 2, kind: input, shape index: {}]
  %s3 = inlined_call_operand.hbm [shape: f32[64,64], index: 3, kind: input, shape index: {}]
  %s4 = inlined_call_operand.vmem [shape: f32[1,64], index: 4, kind: input, shape index: {}]
  %s5 = inlined_call_operand.hbm [shape: f32[64,128], index: 5, kind: input, shape index: {}]
  %s6 = inlined_call_operand.vmem [shape: f32[1,128], index: 6, kind: input, shape index: {}]
  %s7 = inlined_call_operand.hbm [shape: f32[128,128], index: 7, kind: input, shape index: {}]
  %s8 = inlined_call_operand.vmem [shape: f32[1,128], index: 8, kind: input, shape index: {}]
  %s9 = inlined_call_operand.hbm [shape: f32[8,128], index: 9, kind: output, shape index: {}]
  %s10 = sld [smem:[#allocation0]]
  $region66: #{tpu_custom_call.1} parent=0
    _
  %s12 = ssub.s32 1, %s10
  %s13 = scalar_select 0, %s12, %s10
  $region1: #{tpu_custom_call.1} parent=0
    #allocation2 [shape = 'u8[4096]{0}', space=vmem, size = 0x1000, scoped, tag = 'input window, operand 0, single buffered']
    #allocation3 [shape = 's32[1]{0}', space=sflag, size = 0x4, scoped, tag = 'scoped memory for tpu_custom_call.1']
    #allocation4 [shape = 's32[1]{0}', space=sflag, size = 0x4, scoped, tag = 'scoped memory for tpu_custom_call.1']
    #allocation5 [shape = 'u8[16384]{0}', space=vmem, size = 0x4000, scoped, tag = 'input window, operand 1, single buffered']
    #allocation6 [shape = 's32[1]{0}', space=sflag, size = 0x4, scoped, tag = 'scoped memory for tpu_custom_call.1']
    #allocation7 [shape = 'u8[32768]{0}', space=vmem, size = 0x8000, scoped, tag = 'input window, operand 3, single buffered']
    #allocation8 [shape = 'u8[32768]{0}', space=vmem, size = 0x8000, scoped, tag = 'input window, operand 5, single buffered']
    #allocation9 [shape = 's32[1]{0}', space=sflag, size = 0x4, scoped, tag = 'scoped memory for tpu_custom_call.1']
    #allocation10 [shape = 'u8[65536]{0}', space=vmem, size = 0x10000, scoped, tag = 'input window, operand 7, single buffered']
    #allocation11 [shape = 'u8[4096]{0}', space=vmem, size = 0x1000, scoped, tag = 'output window, operand 0, single buffered']
    %14 = vsyncpa [#allocation3], 0
    %15 = vsyncpa [#allocation6], 0
    %16 = vsyncpa [#allocation9], 0
    %17 = vsyncpa [#allocation4], 0
    // Predicated region
    $region2: #{tpu_custom_call.1} parent=1 // pred_check
      _
    $region3: #{tpu_custom_call.1} parent=1 // pred_check_branch
      %19 = sbr.rel (0) target = $region5
    $region4: #{tpu_custom_call.1} parent=1 // pred_region
      %s21 = ssub.s32 128, 128
      %22 = vsyncadd [#allocation3], %s21
      %s24 = sshll.u32 [#allocation2], 4
      %s25 = int_to_ptr.vmem [resolvable:$true] %s24
      %27 = dma.hbm_to_vmem [thread:$0]  %s0, 128, %s25, [#allocation3]
    $region5: #{tpu_custom_call.1} parent=1 // pred_fallthru
      _
    // Predicated region
    $region6: #{tpu_custom_call.1} parent=1 // pred_check
      _
    $region7: #{tpu_custom_call.1} parent=1 // pred_check_branch
      %29 = sbr.rel (0) target = $region9
    $region8: #{tpu_custom_call.1} parent=1 // pred_region
      %s31 = ssub.s32 512, 512
      %32 = vsyncadd [#allocation6], %s31
      %s33 = sshll.u32 [#allocation5], 4
      %s34 = int_to_ptr.vmem [resolvable:$true] %s33
      %39 = dma.hbm_to_vmem [thread:$0]  %s1, 512, %s34, [#allocation6], 128, 128, 8
    $region9: #{tpu_custom_call.1} parent=1 // pred_fallthru
      _
    // Predicated region
    $region10: #{tpu_custom_call.1} parent=1 // pred_check
      _
    $region11: #{tpu_custom_call.1} parent=1 // pred_check_branch
      %41 = sbr.rel (0) target = $region13
    $region12: #{tpu_custom_call.1} parent=1 // pred_region
      _
    $region13: #{tpu_custom_call.1} parent=1 // pred_fallthru
      _
    // Predicated region
    $region14: #{tpu_custom_call.1} parent=1 // pred_check
      _
    $region15: #{tpu_custom_call.1} parent=1 // pred_check_branch
      %43 = sbr.rel (0) target = $region17
    $region16: #{tpu_custom_call.1} parent=1 // pred_region
      %s45 = ssub.s32 1024, 1024
      %46 = vsyncadd [#allocation6], %s45
      %s47 = sshll.u32 [#allocation7], 4
      %s48 = int_to_ptr.vmem [resolvable:$true] %s47
      %53 = dma.hbm_to_vmem [thread:$0]  %s3, 1024, %s48, [#allocation6], 128, 128, 8
    $region17: #{tpu_custom_call.1} parent=1 // pred_fallthru
      _
    // Predicated region
    $region18: #{tpu_custom_call.1} parent=1 // pred_check
      _
    $region19: #{tpu_custom_call.1} parent=1 // pred_check_branch
      %55 = sbr.rel (0) target = $region21
    $region20: #{tpu_custom_call.1} parent=1 // pred_region
      _
    $region21: #{tpu_custom_call.1} parent=1 // pred_fallthru
      _
    // Predicated region
    $region22: #{tpu_custom_call.1} parent=1 // pred_check
      _
    $region23: #{tpu_custom_call.1} parent=1 // pred_check_branch
      %57 = sbr.rel (0) target = $region25
    $region24: #{tpu_custom_call.1} parent=1 // pred_region
      %s59 = ssub.s32 1024, 1024
      %60 = vsyncadd [#allocation9], %s59
      %s61 = sshll.u32 [#allocation8], 4
      %s62 = int_to_ptr.vmem [resolvable:$true] %s61
      %67 = dma.hbm_to_vmem [thread:$0]  %s5, 1024, %s62, [#allocation9], 128, 128, 8
    $region25: #{tpu_custom_call.1} parent=1 // pred_fallthru
      _
    // Predicated region
    $region26: #{tpu_custom_call.1} parent=1 // pred_check
      _
    $region27: #{tpu_custom_call.1} parent=1 // pred_check_branch
      %69 = sbr.rel (0) target = $region29
    $region28: #{tpu_custom_call.1} parent=1 // pred_region
      _
    $region29: #{tpu_custom_call.1} parent=1 // pred_fallthru
      _
    // Predicated region
    $region30: #{tpu_custom_call.1} parent=1 // pred_check
      _
    $region31: #{tpu_custom_call.1} parent=1 // pred_check_branch
      %71 = sbr.rel (0) target = $region33
    $region32: #{tpu_custom_call.1} parent=1 // pred_region
      %s73 = ssub.s32 2048, 2048
      %74 = vsyncadd [#allocation9], %s73
      %s75 = sshll.u32 [#allocation10], 4
      %s76 = int_to_ptr.vmem [resolvable:$true] %s75
      %81 = dma.hbm_to_vmem [thread:$0]  %s7, 2048, %s76, [#allocation9], 128, 128, 8
    $region33: #{tpu_custom_call.1} parent=1 // pred_fallthru
      _
    // Predicated region
    $region34: #{tpu_custom_call.1} parent=1 // pred_check
      _
    $region35: #{tpu_custom_call.1} parent=1 // pred_check_branch
      %83 = sbr.rel (0) target = $region37
    $region36: #{tpu_custom_call.1} parent=1 // pred_region
      _
    $region37: #{tpu_custom_call.1} parent=1 // pred_fallthru
      _
    // Predicated region
    $region38: #{tpu_custom_call.1} parent=1 // pred_check
      _
    $region39: #{tpu_custom_call.1} parent=1 // pred_check_branch
      %85 = sbr.rel (0) target = $region41
    $region40: #{tpu_custom_call.1} parent=1 // pred_region
      %86 = dma.done [#allocation3], 128
    $region41: #{tpu_custom_call.1} parent=1 // pred_fallthru
      _
    // Predicated region
    $region42: #{tpu_custom_call.1} parent=1 // pred_check
      _
    $region43: #{tpu_custom_call.1} parent=1 // pred_check_branch
      %88 = sbr.rel (0) target = $region45
    $region44: #{tpu_custom_call.1} parent=1 // pred_region
      %89 = dma.done [#allocation6], 512
    $region45: #{tpu_custom_call.1} parent=1 // pred_fallthru
      _
    // Predicated region
    $region46: #{tpu_custom_call.1} parent=1 // pred_check
      _
    $region47: #{tpu_custom_call.1} parent=1 // pred_check_branch
      %91 = sbr.rel (0) target = $region49
    $region48: #{tpu_custom_call.1} parent=1 // pred_region
      %92 = dma.done [#allocation6], 1024
    $region49: #{tpu_custom_call.1} parent=1 // pred_fallthru
      _
    // Predicated region
    $region50: #{tpu_custom_call.1} parent=1 // pred_check
      _
    $region51: #{tpu_custom_call.1} parent=1 // pred_check_branch
      %94 = sbr.rel (0) target = $region53
    $region52: #{tpu_custom_call.1} parent=1 // pred_region
      %95 = dma.done [#allocation9], 1024
    $region53: #{tpu_custom_call.1} parent=1 // pred_fallthru
      _
    // Predicated region
    $region54: #{tpu_custom_call.1} parent=1 // pred_check
      _
    $region55: #{tpu_custom_call.1} parent=1 // pred_check_branch
      %97 = sbr.rel (0) target = $region57
    $region56: #{tpu_custom_call.1} parent=1 // pred_region
      %98 = dma.done [#allocation9], 2048
    $region57: #{tpu_custom_call.1} parent=1 // pred_fallthru
      _
    %v99 = vld [vmem:[#allocation2] sm:$0xff]
    %v100 = vld [vmem:[#allocation5] sm:$0xff]
    %v101 = vld [vmem:[#allocation5 + $0x8] sm:$0xff]
    %v102 = vld [vmem:[#allocation5 + $0x10] sm:$0xff]
    %v103 = vld [vmem:[#allocation5 + $0x18] sm:$0xff]
    %v104 = vld [vmem:[%s2] sm:$0x1]
    %v106 = vlaneseq
    %v107 = vshrl.u32 %v106, 7
    %v108 = vsub.s32 0, %v107
    %v109 = vrot.slane %v104, %v108
    %vm111 = vcmask 261120
    %v113 = vsel %vm111, %v99, 0
    %115 = vmatprep.subr.mxu0 0.0
    %116 = vmatpush1.msra.mxu0 0.0
    %117 = vmatprep.subr.mxu0 0.0
    %118 = vmatpush1.msra.mxu0 0.0
    %119 = vmatprep.subr.mxu0 0.0
    %120 = vmatpush1.msra.mxu0 0.0
    %121 = vmatprep.subr.mxu0 0.0
    %122 = vmatpush1.msra.mxu0 0.0
    %123 = vmatprep.subr.mxu0 0.0
    %124 = vmatpush1.msra.mxu0 0.0
    %125 = vmatprep.subr.mxu0 0.0
    %126 = vmatpush1.msra.mxu0 0.0
    %127 = vmatprep.subr.mxu0 0.0
    %128 = vmatpush1.msra.mxu0 0.0
    %129 = vmatprep.subr.mxu0 0.0
    %130 = vmatpush1.msra.mxu0 0.0
    %131 = vmatprep.subr.mxu0 0.0
    %132 = vmatpush1.msra.mxu0 0.0
    %133 = vmatprep.subr.mxu0 0.0
    %134 = vmatpush1.msra.mxu0 0.0
    %135 = vmatprep.subr.mxu0 0.0
    %136 = vmatpush1.msra.mxu0 0.0
    %137 = vmatprep.subr.mxu0 0.0
    %138 = vmatpush1.msra.mxu0 0.0
    %139 = vmatprep.subr.mxu0 0.0
    %140 = vmatpush1.msra.mxu0 %v103
    %141 = vmatprep.subr.mxu0 0.0
    %142 = vmatpush1.msra.mxu0 %v102
    %143 = vmatprep.subr.mxu0 0.0
    %144 = vmatpush1.msra.mxu0 %v101
    %145 = vmatprep.subr.mxu0 0.0
    %146 = vmatpush1.msra.mxu0 %v100
    %147 = vmatprep.subr.mxu0 0.0
    %148 = vmatpush2.msra.mxu0 0.0
    %149 = vmatprep.subr.mxu0 0.0
    %150 = vmatpush2.msra.mxu0 0.0
    %151 = vmatprep.subr.mxu0 0.0
    %152 = vmatpush2.msra.mxu0 0.0
    %153 = vmatprep.subr.mxu0 0.0
    %154 = vmatpush2.msra.mxu0 0.0
    %155 = vmatprep.subr.mxu0 0.0
    %156 = vmatpush2.msra.mxu0 0.0
    %157 = vmatprep.subr.mxu0 0.0
    %158 = vmatpush2.msra.mxu0 0.0
    %159 = vmatprep.subr.mxu0 0.0
    %160 = vmatpush2.msra.mxu0 0.0
    %161 = vmatprep.subr.mxu0 0.0
    %162 = vmatpush2.msra.mxu0 0.0
    %163 = vmatprep.subr.mxu0 0.0
    %164 = vmatpush2.msra.mxu0 0.0
    %165 = vmatprep.subr.mxu0 0.0
    %166 = vmatpush2.msra.mxu0 0.0
    %167 = vmatprep.subr.mxu0 0.0
    %168 = vmatpush2.msra.mxu0 0.0
    %169 = vmatprep.subr.mxu0 0.0
    %170 = vmatpush2.msra.mxu0 0.0
    %171 = vmatprep.subr.mxu0 0.0
    %172 = vmatpush2.msra.mxu0 0.0
    %173 = vmatprep.subr.mxu0 0.0
    %174 = vmatpush2.msra.mxu0 0.0
    %175 = vmatprep.subr.mxu0 0.0
    %176 = vmatpush2.msra.mxu0 0.0
    %177 = vmatprep.subr.mxu0 0.0
    %178 = vmatpush2.msra.mxu0 0.0
    %179 = vmatprep.mubr.f32.mxu0 0.0
    %180 = vmatmul.mubr.f32.gmra.mxu0 %v113
    %v181 = vpop.f32.mrf.mxu0
    %v182 = vadd.f32 %v109, %v181
    %v183 = vpop.f32.mrf.mxu0
    %184 = vdwg.mxu0
    %v185 = vmax.f32 %v182, 0.0
    %v186 = vld [vmem:[#allocation7] sm:$0xff]
    %v187 = vld [vmem:[#allocation7 + $0x8] sm:$0xff]
    %v188 = vld [vmem:[#allocation7 + $0x10] sm:$0xff]
    %v189 = vld [vmem:[#allocation7 + $0x18] sm:$0xff]
    %v190 = vld [vmem:[#allocation7 + $0x20] sm:$0xff]
    %v191 = vld [vmem:[#allocation7 + $0x28] sm:$0xff]
    %v192 = vld [vmem:[#allocation7 + $0x30] sm:$0xff]
    %v193 = vld [vmem:[#allocation7 + $0x38] sm:$0xff]
    %v194 = vld [vmem:[%s4] sm:$0x1]
    %v196 = vlaneseq
    %v197 = vshrl.u32 %v196, 7
    %v198 = vsub.s32 0, %v197
    %v199 = vrot.slane %v194, %v198
    %vm201 = vcmask 523264
    %v203 = vsel %vm201, %v185, 0
    %205 = vmatprep.subr.mxu0 0.0
    %206 = vmatpush1.msra.mxu0 0.0
    %207 = vmatprep.subr.mxu0 0.0
    %208 = vmatpush1.msra.mxu0 0.0
    %209 = vmatprep.subr.mxu0 0.0
    %210 = vmatpush1.msra.mxu0 0.0
    %211 = vmatprep.subr.mxu0 0.0
    %212 = vmatpush1.msra.mxu0 0.0
    %213 = vmatprep.subr.mxu0 0.0
    %214 = vmatpush1.msra.mxu0 0.0
    %215 = vmatprep.subr.mxu0 0.0
    %216 = vmatpush1.msra.mxu0 0.0
    %217 = vmatprep.subr.mxu0 0.0
    %218 = vmatpush1.msra.mxu0 0.0
    %219 = vmatprep.subr.mxu0 0.0
    %220 = vmatpush1.msra.mxu0 0.0
    %221 = vmatprep.subr.mxu0 0.0
    %222 = vmatpush1.msra.mxu0 %v193
    %223 = vmatprep.subr.mxu0 0.0
    %224 = vmatpush1.msra.mxu0 %v192
    %225 = vmatprep.subr.mxu0 0.0
    %226 = vmatpush1.msra.mxu0 %v191
    %227 = vmatprep.subr.mxu0 0.0
    %228 = vmatpush1.msra.mxu0 %v190
    %229 = vmatprep.subr.mxu0 0.0
    %230 = vmatpush1.msra.mxu0 %v189
    %231 = vmatprep.subr.mxu0 0.0
    %232 = vmatpush1.msra.mxu0 %v188
    %233 = vmatprep.subr.mxu0 0.0
    %234 = vmatpush1.msra.mxu0 %v187
    %235 = vmatprep.subr.mxu0 0.0
    %236 = vmatpush1.msra.mxu0 %v186
    %237 = vmatprep.subr.mxu0 0.0
    %238 = vmatpush2.msra.mxu0 0.0
    %239 = vmatprep.subr.mxu0 0.0
    %240 = vmatpush2.msra.mxu0 0.0
    %241 = vmatprep.subr.mxu0 0.0
    %242 = vmatpush2.msra.mxu0 0.0
    %243 = vmatprep.subr.mxu0 0.0
    %244 = vmatpush2.msra.mxu0 0.0
    %245 = vmatprep.subr.mxu0 0.0
    %246 = vmatpush2.msra.mxu0 0.0
    %247 = vmatprep.subr.mxu0 0.0
    %248 = vmatpush2.msra.mxu0 0.0
    %249 = vmatprep.subr.mxu0 0.0
    %250 = vmatpush2.msra.mxu0 0.0
    %251 = vmatprep.subr.mxu0 0.0
    %252 = vmatpush2.msra.mxu0 0.0
    %253 = vmatprep.subr.mxu0 0.0
    %254 = vmatpush2.msra.mxu0 0.0
    %255 = vmatprep.subr.mxu0 0.0
    %256 = vmatpush2.msra.mxu0 0.0
    %257 = vmatprep.subr.mxu0 0.0
    %258 = vmatpush2.msra.mxu0 0.0
    %259 = vmatprep.subr.mxu0 0.0
    %260 = vmatpush2.msra.mxu0 0.0
    %261 = vmatprep.subr.mxu0 0.0
    %262 = vmatpush2.msra.mxu0 0.0
    %263 = vmatprep.subr.mxu0 0.0
    %264 = vmatpush2.msra.mxu0 0.0
    %265 = vmatprep.subr.mxu0 0.0
    %266 = vmatpush2.msra.mxu0 0.0
    %267 = vmatprep.subr.mxu0 0.0
    %268 = vmatpush2.msra.mxu0 0.0
    %269 = vmatprep.mubr.f32.mxu0 0.0
    %270 = vmatmul.mubr.f32.gmra.mxu0 %v203
    %v271 = vpop.f32.mrf.mxu0
    %v272 = vadd.f32 %v199, %v271
    %v273 = vpop.f32.mrf.mxu0
    %274 = vdwg.mxu0
    %v275 = vmax.f32 %v272, 0.0
    %v276 = vld [vmem:[#allocation8] sm:$0xff]
    %v277 = vld [vmem:[#allocation8 + $0x8] sm:$0xff]
    %v278 = vld [vmem:[#allocation8 + $0x10] sm:$0xff]
    %v279 = vld [vmem:[#allocation8 + $0x18] sm:$0xff]
    %v280 = vld [vmem:[#allocation8 + $0x20] sm:$0xff]
    %v281 = vld [vmem:[#allocation8 + $0x28] sm:$0xff]
    %v282 = vld [vmem:[#allocation8 + $0x30] sm:$0xff]
    %v283 = vld [vmem:[#allocation8 + $0x38] sm:$0xff]
    %v284 = vld [vmem:[%s6] sm:$0x1]
    %v286 = vlaneseq
    %v287 = vshrl.u32 %v286, 7
    %v288 = vsub.s32 0, %v287
    %v289 = vrot.slane %v284, %v288
    %v292 = vsel %vm201, %v275, 0
    %294 = vmatprep.subr.mxu0 0.0
    %295 = vmatpush1.msra.mxu0 0.0
    %296 = vmatprep.subr.mxu0 0.0
    %297 = vmatpush1.msra.mxu0 0.0
    %298 = vmatprep.subr.mxu0 0.0
    %299 = vmatpush1.msra.mxu0 0.0
    %300 = vmatprep.subr.mxu0 0.0
    %301 = vmatpush1.msra.mxu0 0.0
    %302 = vmatprep.subr.mxu0 0.0
    %303 = vmatpush1.msra.mxu0 0.0
    %304 = vmatprep.subr.mxu0 0.0
    %305 = vmatpush1.msra.mxu0 0.0
    %306 = vmatprep.subr.mxu0 0.0
    %307 = vmatpush1.msra.mxu0 0.0
    %308 = vmatprep.subr.mxu0 0.0
    %309 = vmatpush1.msra.mxu0 0.0
    %310 = vmatprep.subr.mxu0 0.0
    %311 = vmatpush1.msra.mxu0 %v283
    %312 = vmatprep.subr.mxu0 0.0
    %313 = vmatpush1.msra.mxu0 %v282
    %314 = vmatprep.subr.mxu0 0.0
    %315 = vmatpush1.msra.mxu0 %v281
    %316 = vmatprep.subr.mxu0 0.0
    %317 = vmatpush1.msra.mxu0 %v280
    %318 = vmatprep.subr.mxu0 0.0
    %319 = vmatpush1.msra.mxu0 %v279
    %320 = vmatprep.subr.mxu0 0.0
    %321 = vmatpush1.msra.mxu0 %v278
    %322 = vmatprep.subr.mxu0 0.0
    %323 = vmatpush1.msra.mxu0 %v277
    %324 = vmatprep.subr.mxu0 0.0
    %325 = vmatpush1.msra.mxu0 %v276
    %326 = vmatprep.subr.mxu0 0.0
    %327 = vmatpush2.msra.mxu0 0.0
    %328 = vmatprep.subr.mxu0 0.0
    %329 = vmatpush2.msra.mxu0 0.0
    %330 = vmatprep.subr.mxu0 0.0
    %331 = vmatpush2.msra.mxu0 0.0
    %332 = vmatprep.subr.mxu0 0.0
    %333 = vmatpush2.msra.mxu0 0.0
    %334 = vmatprep.subr.mxu0 0.0
    %335 = vmatpush2.msra.mxu0 0.0
    %336 = vmatprep.subr.mxu0 0.0
    %337 = vmatpush2.msra.mxu0 0.0
    %338 = vmatprep.subr.mxu0 0.0
    %339 = vmatpush2.msra.mxu0 0.0
    %340 = vmatprep.subr.mxu0 0.0
    %341 = vmatpush2.msra.mxu0 0.0
    %342 = vmatprep.subr.mxu0 0.0
    %343 = vmatpush2.msra.mxu0 0.0
    %344 = vmatprep.subr.mxu0 0.0
    %345 = vmatpush2.msra.mxu0 0.0
    %346 = vmatprep.subr.mxu0 0.0
    %347 = vmatpush2.msra.mxu0 0.0
    %348 = vmatprep.subr.mxu0 0.0
    %349 = vmatpush2.msra.mxu0 0.0
    %350 = vmatprep.subr.mxu0 0.0
    %351 = vmatpush2.msra.mxu0 0.0
    %352 = vmatprep.subr.mxu0 0.0
    %353 = vmatpush2.msra.mxu0 0.0
    %354 = vmatprep.subr.mxu0 0.0
    %355 = vmatpush2.msra.mxu0 0.0
    %356 = vmatprep.subr.mxu0 0.0
    %357 = vmatpush2.msra.mxu0 0.0
    %358 = vmatprep.mubr.f32.mxu0 0.0
    %359 = vmatmul.mubr.f32.gmra.mxu0 %v292
    %v360 = vpop.f32.mrf.mxu0
    %v361 = vadd.f32 %v289, %v360
    %v362 = vpop.f32.mrf.mxu0
    %363 = vdwg.mxu0
    %v364 = vmax.f32 %v361, 0.0
    %v365 = vld [vmem:[#allocation10] sm:$0xff]
    %v366 = vld [vmem:[#allocation10 + $0x8] sm:$0xff]
    %v367 = vld [vmem:[#allocation10 + $0x10] sm:$0xff]
    %v368 = vld [vmem:[#allocation10 + $0x18] sm:$0xff]
    %v369 = vld [vmem:[#allocation10 + $0x20] sm:$0xff]
    %v370 = vld [vmem:[#allocation10 + $0x28] sm:$0xff]
    %v371 = vld [vmem:[#allocation10 + $0x30] sm:$0xff]
    %v372 = vld [vmem:[#allocation10 + $0x38] sm:$0xff]
    %v373 = vld [vmem:[#allocation10 + $0x40] sm:$0xff]
    %v374 = vld [vmem:[#allocation10 + $0x48] sm:$0xff]
    %v375 = vld [vmem:[#allocation10 + $0x50] sm:$0xff]
    %v376 = vld [vmem:[#allocation10 + $0x58] sm:$0xff]
    %v377 = vld [vmem:[#allocation10 + $0x60] sm:$0xff]
    %v378 = vld [vmem:[#allocation10 + $0x68] sm:$0xff]
    %v379 = vld [vmem:[#allocation10 + $0x70] sm:$0xff]
    %v380 = vld [vmem:[#allocation10 + $0x78] sm:$0xff]
    %v381 = vld [vmem:[%s8] sm:$0x1]
    %v383 = vlaneseq
    %v384 = vshrl.u32 %v383, 7
    %v385 = vsub.s32 0, %v384
    %v386 = vrot.slane %v381, %v385
    %388 = vmatprep.subr.mxu0 0.0
    %389 = vmatpush1.msra.mxu0 %v380
    %390 = vmatprep.subr.mxu0 0.0
    %391 = vmatpush1.msra.mxu0 %v379
    %392 = vmatprep.subr.mxu0 0.0
    %393 = vmatpush1.msra.mxu0 %v378
    %394 = vmatprep.subr.mxu0 0.0
    %395 = vmatpush1.msra.mxu0 %v377
    %396 = vmatprep.subr.mxu0 0.0
    %397 = vmatpush1.msra.mxu0 %v376
    %398 = vmatprep.subr.mxu0 0.0
    %399 = vmatpush1.msra.mxu0 %v375
    %400 = vmatprep.subr.mxu0 0.0
    %401 = vmatpush1.msra.mxu0 %v374
    %402 = vmatprep.subr.mxu0 0.0
    %403 = vmatpush1.msra.mxu0 %v373
    %404 = vmatprep.subr.mxu0 0.0
    %405 = vmatpush1.msra.mxu0 %v372
    %406 = vmatprep.subr.mxu0 0.0
    %407 = vmatpush1.msra.mxu0 %v371
    %408 = vmatprep.subr.mxu0 0.0
    %409 = vmatpush1.msra.mxu0 %v370
    %410 = vmatprep.subr.mxu0 0.0
    %411 = vmatpush1.msra.mxu0 %v369
    %412 = vmatprep.subr.mxu0 0.0
    %413 = vmatpush1.msra.mxu0 %v368
    %414 = vmatprep.subr.mxu0 0.0
    %415 = vmatpush1.msra.mxu0 %v367
    %416 = vmatprep.subr.mxu0 0.0
    %417 = vmatpush1.msra.mxu0 %v366
    %418 = vmatprep.subr.mxu0 0.0
    %419 = vmatpush1.msra.mxu0 %v365
    %420 = vmatprep.subr.mxu0 0.0
    %421 = vmatpush2.msra.mxu0 0.0
    %422 = vmatprep.subr.mxu0 0.0
    %423 = vmatpush2.msra.mxu0 0.0
    %424 = vmatprep.subr.mxu0 0.0
    %425 = vmatpush2.msra.mxu0 0.0
    %426 = vmatprep.subr.mxu0 0.0
    %427 = vmatpush2.msra.mxu0 0.0
    %428 = vmatprep.subr.mxu0 0.0
    %429 = vmatpush2.msra.mxu0 0.0
    %430 = vmatprep.subr.mxu0 0.0
    %431 = vmatpush2.msra.mxu0 0.0
    %432 = vmatprep.subr.mxu0 0.0
    %433 = vmatpush2.msra.mxu0 0.0
    %434 = vmatprep.subr.mxu0 0.0
    %435 = vmatpush2.msra.mxu0 0.0
    %436 = vmatprep.subr.mxu0 0.0
    %437 = vmatpush2.msra.mxu0 0.0
    %438 = vmatprep.subr.mxu0 0.0
    %439 = vmatpush2.msra.mxu0 0.0
    %440 = vmatprep.subr.mxu0 0.0
    %441 = vmatpush2.msra.mxu0 0.0
    %442 = vmatprep.subr.mxu0 0.0
    %443 = vmatpush2.msra.mxu0 0.0
    %444 = vmatprep.subr.mxu0 0.0
    %445 = vmatpush2.msra.mxu0 0.0
    %446 = vmatprep.subr.mxu0 0.0
    %447 = vmatpush2.msra.mxu0 0.0
    %448 = vmatprep.subr.mxu0 0.0
    %449 = vmatpush2.msra.mxu0 0.0
    %450 = vmatprep.subr.mxu0 0.0
    %451 = vmatpush2.msra.mxu0 0.0
    %452 = vmatprep.mubr.f32.mxu0 0.0
    %453 = vmatmul.mubr.f32.gmra.mxu0 %v364
    %v454 = vpop.f32.mrf.mxu0
    %v455 = vadd.f32 %v386, %v454
    %v456 = vpop.f32.mrf.mxu0
    %457 = vdwg.mxu0
    %v458 = vlaneseq
    %v459 = vand.u32 %v458, 127
    %vm460 = vcmp.lt.s32.totalorder %v459, 8
    %v461 = vsel %vm460, %v455, -inf
    %462 = vmax.xlane.f32.xlu0 %v461
    %v463 = vpop.xlane.xlu0 %462
    %v464 = vsub.f32 %v461, %v463
    %v465 = vmul.f32 %v464, 1.442695
    %v466 = vpow.pop %v465
    %467 = vadd.xlane.f32.xlu0 %v466
    %v468 = vpop.xlane.xlu0 %467
    %v469 = vrcp.pop %v468
    %v470 = vmul.f32 %v466, %v469
    %vm471 = vcmp.eq.s32.totalorder %v459, 8
    %v472 = vsel %vm471, %v455, 0.0
    %v473 = vsel %vm460, %v470, %v472
    %474 = vst [vmem:[#allocation11] sm:$0xff] %v473
    // Predicated region
    $region58: #{tpu_custom_call.1} parent=1 // pred_check
      _
    $region59: #{tpu_custom_call.1} parent=1 // pred_check_branch
      %476 = sbr.rel (0) target = $region61
    $region60: #{tpu_custom_call.1} parent=1 // pred_region
      %s478 = ssub.s32 128, 128
      %479 = vsyncadd [#allocation4], %s478
      %s481 = sshll.u32 [#allocation11], 4
      %s482 = int_to_ptr.vmem [resolvable:$true] %s481
      %484 = dma.vmem_to_hbm [thread:$0]  %s482, 128, %s9, [#allocation4]
    $region61: #{tpu_custom_call.1} parent=1 // pred_fallthru
      _
    // Predicated region
    $region62: #{tpu_custom_call.1} parent=1 // pred_check
      _
    $region63: #{tpu_custom_call.1} parent=1 // pred_check_branch
      %486 = sbr.rel (0) target = $region65
    $region64: #{tpu_custom_call.1} parent=1 // pred_region
      %487 = dma.done [#allocation4], 128
    $region65: #{tpu_custom_call.1} parent=1 // pred_fallthru
      _
    %488 = vsyncpa [#allocation3], 1
    %489 = vsyncpa [#allocation6], 1
    %490 = vsyncpa [#allocation9], 1
    %491 = vsyncpa [#allocation4], 1

</llo_original>
